<compile_context>
chip_gen: v5e
topology: v5e:2x2
jax: 0.10.0
libtpu: 0.0.40
codegen_flags: <defaults>
</compile_context>

<pallas_src>
import math

import jax
import jax.numpy as jnp
from jax.experimental import pallas as pl
from jax.experimental.pallas import tpu as pltpu

HIDDEN = 256
LANE = 128


def _round_up(x, m):
    return (x + m - 1) // m * m


def policy_net_kernel(x_ref, w1_ref, b1_ref, w2_ref, b2_ref, w3_ref, b3_ref, o_ref):
    """One batch tile per grid step; three back-to-back MXU matmuls.

    MXU operands are the (possibly bf16) weight dtype; accumulation is f32;
    bias add / ReLU / tanh epilogues stay f32 (VPU / EUP).
    """
    x = x_ref[...].astype(w1_ref.dtype)

    h1 = jnp.dot(x, w1_ref[...], preferred_element_type=jnp.float32) + b1_ref[...]
    h1 = jnp.maximum(h1, 0.0)                                     # ReLU (f32 VPU)

    h2 = jnp.dot(h1.astype(w2_ref.dtype), w2_ref[...],
                 preferred_element_type=jnp.float32) + b2_ref[...]
    h2 = jnp.maximum(h2, 0.0)                                     # ReLU (f32 VPU)

    h3 = jnp.dot(h2.astype(w3_ref.dtype), w3_ref[...],
                 preferred_element_type=jnp.float32) + b3_ref[...]
    o_ref[...] = jnp.tanh(h3).astype(o_ref.dtype)                 # tanh (f32 EUP)


def _weight_spec(shape):
    """Constant-index (VMEM-resident) operand; single-buffered where supported."""
    index_map = lambda i: (0, 0)
    if hasattr(pl, "Buffered"):
        try:
            return pl.BlockSpec(shape, index_map, pipeline_mode=pl.Buffered(1))
        except (TypeError, ValueError):
            pass
    return pl.BlockSpec(shape, index_map)


def prepare_policy_params(params, weights_dtype=jnp.bfloat16):
    """One-time transform of raw f32 params into kernel-ready operands.

    * W3 / b3 are zero-padded to a 128-lane output slab (unmasked final vst).
    * Weights are cast to `weights_dtype` (bf16 = native MXU path, half the
      weight DMA bytes).  Biases stay f32 so epilogues are f32 everywhere.
    Call once at init / after each parameter update, not per forward step.
    """
    w1, b1 = params["w1"], params["b1"]
    w2, b2 = params["w2"], params["b2"]
    w3, b3 = params["w3"], params["b3"]

    hidden = w1.shape[1]
    action_dim = w3.shape[1]
    n_pad = _round_up(action_dim, LANE)

    f32 = jnp.float32
    w3_p = jnp.zeros((hidden, n_pad), f32).at[:, :action_dim].set(w3.astype(f32))
    b3_p = jnp.zeros((1, n_pad), f32).at[:, :action_dim].set(b3.astype(f32))

    return {
        "w1": w1.astype(weights_dtype),
        "b1": b1.astype(f32),
        "w2": w2.astype(weights_dtype),
        "b2": b2.astype(f32),
        "w3": w3_p.astype(weights_dtype),
        "b3": b3_p,
        "action_dim": action_dim,  # static python int (only used for slicing)
    }


def policy_net_forward(obs, prepared, *, batch_tile=None):
    """obs: (B, observation_dim) float32; prepared: prepare_policy_params output."""
    w1, b1 = prepared["w1"], prepared["b1"]
    w2, b2 = prepared["w2"], prepared["b2"]
    w3, b3 = prepared["w3"], prepared["b3"]
    action_dim = prepared["action_dim"]

    obs_dim, hidden = w1.shape
    n_pad = w3.shape[1]
    B = obs.shape[0]

    obs = jnp.asarray(obs, jnp.float32)  # no-op if already f32; bf16 cast is in-kernel

    # Batch tiling: big tiles to amortize the ~0.35 us/step grid overhead, but
    # at least 2 tiles for mid-size batches so both v7x TensorCores get work.
    if batch_tile is None:
        if B <= 8:
            batch_tile = 8
        elif B <= 1024:
            batch_tile = _round_up(pl.cdiv(B, 2), 8)
        else:
            batch_tile = 512
    grid = (pl.cdiv(B, batch_tile),)

    weight_bytes = (
        w1.size * w1.dtype.itemsize
        + w2.size * w2.dtype.itemsize
        + w3.size * w3.dtype.itemsize
        + (b1.size + b2.size + b3.size) * 4
    )
    cost = pl.CostEstimate(
        flops=2 * B * (obs_dim * hidden + hidden * hidden + hidden * n_pad),
        transcendentals=B * n_pad,
        bytes_accessed=B * obs_dim * 4 + weight_bytes + B * n_pad * 4,
    )

    out = pl.pallas_call(
        policy_net_kernel,
        out_shape=jax.ShapeDtypeStruct((B, n_pad), jnp.float32),
        grid=grid,
        in_specs=[
            # obs tile: last dim == full array dim (no lane padding), ragged last tile OK.
            pl.BlockSpec((batch_tile, obs_dim), lambda i: (i, 0)),
            _weight_spec((obs_dim, hidden)),   # W1
            _weight_spec((1, hidden)),         # b1
            _weight_spec((hidden, hidden)),    # W2
            _weight_spec((1, hidden)),         # b2
            _weight_spec((hidden, n_pad)),     # W3 (lane-padded N)
            _weight_spec((1, n_pad)),          # b3 (lane-padded N)
        ],
        out_specs=pl.BlockSpec((batch_tile, n_pad), lambda i: (i, 0)),
        compiler_params=pltpu.CompilerParams(
            dimension_semantics=("parallel",),   # batch tiles shard across TCs (v7x)
            vmem_limit_bytes=32 << 20,
        ),
        cost_estimate=cost,
    )(obs, w1, b1, w2, b2, w3, b3)

    # Strip lane padding (batch is not padded at all).
    return out[:, :action_dim]


def init_policy_params(key, observation_dim, action_dim, hidden=HIDDEN):
    """Deterministic init mimicking nn.Linear default: U(-1/sqrt(fan_in), 1/sqrt(fan_in))."""
    keys = jax.random.split(key, 6)

    def linear(kw, kb, fan_in, fan_out):
        bound = 1.0 / math.sqrt(fan_in)
        w = jax.random.uniform(kw, (fan_in, fan_out), jnp.float32, -bound, bound)
        b = jax.random.uniform(kb, (1, fan_out), jnp.float32, -bound, bound)
        return w, b

    w1, b1 = linear(keys[0], keys[1], observation_dim, hidden)
    w2, b2 = linear(keys[2], keys[3], hidden, hidden)
    w3, b3 = linear(keys[4], keys[5], hidden, action_dim)
    return {"w1": w1, "b1": b1, "w2": w2, "b2": b2, "w3": w3, "b3": b3}


def policy_net_reference(obs, params):
    dot = lambda a, b: jnp.dot(a, b, precision=jax.lax.Precision.HIGHEST)
    h1 = jnp.maximum(dot(obs, params["w1"]) + params["b1"], 0.0)
    h2 = jnp.maximum(dot(h1, params["w2"]) + params["b2"], 0.0)
    return jnp.tanh(dot(h2, params["w3"]) + params["b3"])


if __name__ == "__main__":
    observation_dim = 16
    action_dim = 4
    batch = 2

    key = jax.random.PRNGKey(0)
    k_params, k_obs = jax.random.split(key)

    params = init_policy_params(k_params, observation_dim, action_dim)
    obs = jax.random.normal(k_obs, (batch, observation_dim), jnp.float32)
    ref = policy_net_reference(obs, params)

    # f32-operand path (checks kernel math / structure).
    prepared_f32 = prepare_policy_params(params, weights_dtype=jnp.float32)
    out_f32 = jax.block_until_ready(policy_net_forward(obs, prepared_f32))
    assert out_f32.shape == (batch, action_dim), out_f32.shape
    assert jnp.allclose(out_f32, ref, atol=2e-2, rtol=0), "f32 path mismatch vs reference"

    # Default fast path: bf16 MXU operands, f32 accumulate / epilogue.
    prepared = prepare_policy_params(params)
    out_bf16 = jax.block_until_ready(policy_net_forward(obs, prepared))
    assert out_bf16.shape == (batch, action_dim), out_bf16.shape
    assert jnp.allclose(out_bf16, ref, atol=4e-2, rtol=0), "bf16 path mismatch vs reference"

    # Rollout-sized batch: grid over batch tiles (>=2 tiles -> both v7x TCs busy).
    big_B = 512
    obs_big = jax.random.normal(jax.random.PRNGKey(1), (big_B, observation_dim), jnp.float32)
    out_big = jax.block_until_ready(policy_net_forward(obs_big, prepared))
    ref_big = policy_net_reference(obs_big, params)
    assert out_big.shape == (big_B, action_dim), out_big.shape
    assert jnp.allclose(out_big, ref_big, atol=4e-2, rtol=0), "batched mismatch vs reference"

    print("KERNEL_OK")
</pallas_src>

<mosaic_0001>
module attributes {stable_mosaic.version = 11 : i64} {
  func.func @policy_net_kernel(%arg0: i32, %arg1: memref<8x16xf32, #tpu.memory_space<vmem>>, %arg2: memref<16x256xf32, #tpu.memory_space<vmem>>, %arg3: memref<1x256xf32, #tpu.memory_space<vmem>>, %arg4: memref<256x256xf32, #tpu.memory_space<vmem>>, %arg5: memref<1x256xf32, #tpu.memory_space<vmem>>, %arg6: memref<256x128xf32, #tpu.memory_space<vmem>>, %arg7: memref<1x128xf32, #tpu.memory_space<vmem>>, %arg8: memref<8x128xf32, #tpu.memory_space<vmem>>) attributes {dimension_semantics = [#tpu.dimension_semantics<parallel>], iteration_bounds = array<i64: 1>, scalar_prefetch = 0 : i64, scratch_operands = 0 : i64, tpu.core_type = #tpu.core_type<tc>, window_params = [{transform_indices = @transform_0, window_bounds = array<i64: 8, 16>}, {pipeline_mode = #tpu.pipeline_mode<synchronous>, transform_indices = @transform_1, window_bounds = array<i64: 16, 256>}, {pipeline_mode = #tpu.pipeline_mode<synchronous>, transform_indices = @transform_2, window_bounds = array<i64: 1, 256>}, {pipeline_mode = #tpu.pipeline_mode<synchronous>, transform_indices = @transform_3, window_bounds = array<i64: 256, 256>}, {pipeline_mode = #tpu.pipeline_mode<synchronous>, transform_indices = @transform_4, window_bounds = array<i64: 1, 256>}, {pipeline_mode = #tpu.pipeline_mode<synchronous>, transform_indices = @transform_5, window_bounds = array<i64: 256, 128>}, {pipeline_mode = #tpu.pipeline_mode<synchronous>, transform_indices = @transform_6, window_bounds = array<i64: 1, 128>}, {transform_indices = @transform_7, window_bounds = array<i64: 8, 128>}]} {
    %c0 = arith.constant 0 : index
    %c0_0 = arith.constant 0 : index
    %0 = vector.load %arg1[%c0, %c0_0] : memref<8x16xf32, #tpu.memory_space<vmem>>, vector<8x16xf32>
    %c0_1 = arith.constant 0 : index
    %c0_2 = arith.constant 0 : index
    %1 = vector.load %arg2[%c0_1, %c0_2] : memref<16x256xf32, #tpu.memory_space<vmem>>, vector<16x256xf32>
    %cst = arith.constant dense<0.000000e+00> : vector<8x256xf32>
    %2 = tpu.matmul %0, %1, %cst {dimension_numbers = #tpu.dot_dimension_numbers<[1], [0], [0], [1], [0, 0, 1, 1], [], []>} : vector<8x16xf32>, vector<16x256xf32>, vector<8x256xf32> -> vector<8x256xf32>
    %c0_3 = arith.constant 0 : index
    %c0_4 = arith.constant 0 : index
    %3 = vector.load %arg3[%c0_3, %c0_4] : memref<1x256xf32, #tpu.memory_space<vmem>>, vector<1x256xf32>
    %4 = vector.broadcast %3 : vector<1x256xf32> to vector<8x256xf32>
    %5 = arith.addf %2, %4 : vector<8x256xf32>
    %cst_5 = arith.constant 0.000000e+00 : f32
    %6 = vector.broadcast %cst_5 : f32 to vector<8x256xf32>
    %7 = arith.maximumf %5, %6 : vector<8x256xf32>
    %c0_6 = arith.constant 0 : index
    %c0_7 = arith.constant 0 : index
    %8 = vector.load %arg4[%c0_6, %c0_7] : memref<256x256xf32, #tpu.memory_space<vmem>>, vector<256x256xf32>
    %cst_8 = arith.constant dense<0.000000e+00> : vector<8x256xf32>
    %9 = tpu.matmul %7, %8, %cst_8 {dimension_numbers = #tpu.dot_dimension_numbers<[1], [0], [0], [1], [0, 0, 1, 1], [], []>} : vector<8x256xf32>, vector<256x256xf32>, vector<8x256xf32> -> vector<8x256xf32>
    %c0_9 = arith.constant 0 : index
    %c0_10 = arith.constant 0 : index
    %10 = vector.load %arg5[%c0_9, %c0_10] : memref<1x256xf32, #tpu.memory_space<vmem>>, vector<1x256xf32>
    %11 = vector.broadcast %10 : vector<1x256xf32> to vector<8x256xf32>
    %12 = arith.addf %9, %11 : vector<8x256xf32>
    %cst_11 = arith.constant 0.000000e+00 : f32
    %13 = vector.broadcast %cst_11 : f32 to vector<8x256xf32>
    %14 = arith.maximumf %12, %13 : vector<8x256xf32>
    %c0_12 = arith.constant 0 : index
    %c0_13 = arith.constant 0 : index
    %15 = vector.load %arg6[%c0_12, %c0_13] : memref<256x128xf32, #tpu.memory_space<vmem>>, vector<256x128xf32>
    %cst_14 = arith.constant dense<0.000000e+00> : vector<8x128xf32>
    %16 = tpu.matmul %14, %15, %cst_14 {dimension_numbers = #tpu.dot_dimension_numbers<[1], [0], [0], [1], [0, 0, 1, 1], [], []>} : vector<8x256xf32>, vector<256x128xf32>, vector<8x128xf32> -> vector<8x128xf32>
    %c0_15 = arith.constant 0 : index
    %c0_16 = arith.constant 0 : index
    %17 = vector.load %arg7[%c0_15, %c0_16] : memref<1x128xf32, #tpu.memory_space<vmem>>, vector<1x128xf32>
    %18 = vector.broadcast %17 : vector<1x128xf32> to vector<8x128xf32>
    %19 = arith.addf %16, %18 : vector<8x128xf32>
    %20 = math.tanh %19 : vector<8x128xf32>
    %c0_17 = arith.constant 0 : index
    %c0_18 = arith.constant 0 : index
    %21 = vector.load %arg8[%c0_17, %c0_18] : memref<8x128xf32, #tpu.memory_space<vmem>>, vector<8x128xf32>
    tpu.vector_store %arg8[%c0_17, %c0_18], %20 {strides = array<i32>} : memref<8x128xf32, #tpu.memory_space<vmem>>, vector<8x128xf32>,
    return
  }
  func.func @transform_0(%arg0: i32) -> (i32, i32) {
    %c0_i32 = arith.constant 0 : i32
    %c0_i32_0 = arith.constant 0 : i32
    return %arg0, %c0_i32 : i32, i32
  }
  func.func @transform_1(%arg0: i32) -> (i32, i32) {
    %c0_i32 = arith.constant 0 : i32
    %c0_i32_0 = arith.constant 0 : i32
    %c0_i32_1 = arith.constant 0 : i32
    return %c0_i32, %c0_i32_0 : i32, i32
  }
  func.func @transform_2(%arg0: i32) -> (i32, i32) {
    %c0_i32 = arith.constant 0 : i32
    %c0_i32_0 = arith.constant 0 : i32
    %c0_i32_1 = arith.constant 0 : i32
    return %c0_i32, %c0_i32_0 : i32, i32
  }
  func.func @transform_3(%arg0: i32) -> (i32, i32) {
    %c0_i32 = arith.constant 0 : i32
    %c0_i32_0 = arith.constant 0 : i32
    %c0_i32_1 = arith.constant 0 : i32
    return %c0_i32, %c0_i32_0 : i32, i32
  }
  func.func @transform_4(%arg0: i32) -> (i32, i32) {
    %c0_i32 = arith.constant 0 : i32
    %c0_i32_0 = arith.constant 0 : i32
    %c0_i32_1 = arith.constant 0 : i32
    return %c0_i32, %c0_i32_0 : i32, i32
  }
  func.func @transform_5(%arg0: i32) -> (i32, i32) {
    %c0_i32 = arith.constant 0 : i32
    %c0_i32_0 = arith.constant 0 : i32
    %c0_i32_1 = arith.constant 0 : i32
    return %c0_i32, %c0_i32_0 : i32, i32
  }
  func.func @transform_6(%arg0: i32) -> (i32, i32) {
    %c0_i32 = arith.constant 0 : i32
    %c0_i32_0 = arith.constant 0 : i32
    %c0_i32_1 = arith.constant 0 : i32
    return %c0_i32, %c0_i32_0 : i32, i32
  }
  func.func @transform_7(%arg0: i32) -> (i32, i32) {
    %c0_i32 = arith.constant 0 : i32
    %c0_i32_0 = arith.constant 0 : i32
    return %arg0, %c0_i32 : i32, i32
  }
}

</mosaic_0001>

<llo_original>
// kernel: tpu_custom_call.1
$region0: #{tpu_custom_call.1}
  #allocation0 [shape = 'u32[]', space=smem, size = 0x4, offset = 0x4, fixed_abs, tag = 'smem constant byte address 0x4 - core index']
  #allocation1 [shape = 'u32[72,128]{1,0:T(1,128)}', space=vmem, size = 0x9000, scoped, tag = 'internal scratch']
  %s0 = inlined_call_operand.hbm [shape: f32[2,16], index: 0, kind: input, shape index: {}]
  %s1 = inlined_call_operand.hbm [shape: f32[16,256], index: 1, kind: input, shape index: {}]
  %s2 = inlined_call_operand.hbm [shape: f32[1,256], index: 2, kind: input, shape index: {}]
  %s3 = inlined_call_operand.hbm [shape: f32[256,256], index: 3, kind: input, shape index: {}]
  %s4 = inlined_call_operand.vmem [shape: f32[1,256], index: 4, kind: input, shape index: {}]
  %s5 = inlined_call_operand.hbm [shape: f32[256,128], index: 5, kind: input, shape index: {}]
  %s6 = inlined_call_operand.vmem [shape: f32[1,128], index: 6, kind: input, shape index: {}]
  %s7 = inlined_call_operand.hbm [shape: f32[2,128], index: 7, kind: output, shape index: {}]
  %s8 = sld [smem:[#allocation0]]
  $region58: #{tpu_custom_call.1} parent=0
    _
  %s10 = ssub.s32 1, %s8
  %s11 = scalar_select 0, %s10, %s8
  $region1: #{tpu_custom_call.1} parent=0
    #allocation2 [shape = 'u8[4096]{0}', space=vmem, size = 0x1000, scoped, tag = 'input window, operand 0, single buffered']
    #allocation3 [shape = 's32[1]{0}', space=sflag, size = 0x4, scoped, tag = 'scoped memory for tpu_custom_call.1']
    #allocation4 [shape = 's32[1]{0}', space=sflag, size = 0x4, scoped, tag = 'scoped memory for tpu_custom_call.1']
    #allocation5 [shape = 'u8[16384]{0}', space=vmem, size = 0x4000, scoped, tag = 'input window, operand 1, single buffered']
    #allocation6 [shape = 's32[1]{0}', space=sflag, size = 0x4, scoped, tag = 'scoped memory for tpu_custom_call.1']
    #allocation7 [shape = 'u8[1024]{0}', space=vmem, size = 0x400, scoped, tag = 'input window, operand 2, single buffered']
    #allocation8 [shape = 'u8[262144]{0}', space=vmem, size = 0x40000, scoped, tag = 'input window, operand 3, single buffered']
    #allocation9 [shape = 's32[1]{0}', space=sflag, size = 0x4, scoped, tag = 'scoped memory for tpu_custom_call.1']
    #allocation10 [shape = 'u8[131072]{0}', space=vmem, size = 0x20000, scoped, tag = 'input window, operand 5, single buffered']
    #allocation11 [shape = 'u8[4096]{0}', space=vmem, size = 0x1000, scoped, tag = 'output window, operand 0, single buffered']
    %12 = vsyncpa [#allocation3], 0
    %13 = vsyncpa [#allocation6], 0
    %14 = vsyncpa [#allocation9], 0
    %15 = vsyncpa [#allocation4], 0
    // Predicated region
    $region2: #{tpu_custom_call.1} parent=1 // pred_check
      _
    $region3: #{tpu_custom_call.1} parent=1 // pred_check_branch
      %17 = sbr.rel (0) target = $region5
    $region4: #{tpu_custom_call.1} parent=1 // pred_region
      %19 = vsyncadd [#allocation3], 96
      %s20 = sshll.u32 %s0, 4
      %s21 = int_to_ptr.hbm [resolvable:$true] %s20
      %s22 = sshll.u32 [#allocation2], 4
      %s23 = int_to_ptr.vmem [resolvable:$true] %s22
      %28 = dma.hbm_to_vmem [thread:$0]  %s21, 32, %s23, [#allocation3], 32, 32, 2
    $region5: #{tpu_custom_call.1} parent=1 // pred_fallthru
      _
    // Predicated region
    $region6: #{tpu_custom_call.1} parent=1 // pred_check
      _
    $region7: #{tpu_custom_call.1} parent=1 // pred_check_branch
      %30 = sbr.rel (0) target = $region9
    $region8: #{tpu_custom_call.1} parent=1 // pred_region
      %32 = vsyncadd [#allocation6], 0
      %s33 = sshll.u32 %s1, 4
      %s34 = int_to_ptr.hbm [resolvable:$true] %s33
      %s35 = sshll.u32 [#allocation5], 4
      %s36 = int_to_ptr.vmem [resolvable:$true] %s35
      %41 = dma.hbm_to_vmem [thread:$0]  %s34, 512, %s36, [#allocation6], 256, 256, 16
    $region9: #{tpu_custom_call.1} parent=1 // pred_fallthru
      _
    // Predicated region
    $region10: #{tpu_custom_call.1} parent=1 // pred_check
      _
    $region11: #{tpu_custom_call.1} parent=1 // pred_check_branch
      %43 = sbr.rel (0) target = $region13
    $region12: #{tpu_custom_call.1} parent=1 // pred_region
      %45 = vsyncadd [#allocation6], 0
      %s47 = sshll.u32 %s2, 4
      %s48 = int_to_ptr.hbm [resolvable:$true] %s47
      %s49 = sshll.u32 [#allocation7], 4
      %s50 = int_to_ptr.vmem [resolvable:$true] %s49
      %52 = dma.hbm_to_vmem [thread:$0]  %s48, 32, %s50, [#allocation6]
    $region13: #{tpu_custom_call.1} parent=1 // pred_fallthru
      _
    // Predicated region
    $region14: #{tpu_custom_call.1} parent=1 // pred_check
      _
    $region15: #{tpu_custom_call.1} parent=1 // pred_check_branch
      %54 = sbr.rel (0) target = $region17
    $region16: #{tpu_custom_call.1} parent=1 // pred_region
      %56 = vsyncadd [#allocation9], 0
      %s57 = sshll.u32 %s3, 4
      %s58 = int_to_ptr.hbm [resolvable:$true] %s57
      %s59 = sshll.u32 [#allocation8], 4
      %s60 = int_to_ptr.vmem [resolvable:$true] %s59
      %65 = dma.hbm_to_vmem [thread:$0]  %s58, 8192, %s60, [#allocation9], 256, 256, 16
    $region17: #{tpu_custom_call.1} parent=1 // pred_fallthru
      _
    // Predicated region
    $region18: #{tpu_custom_call.1} parent=1 // pred_check
      _
    $region19: #{tpu_custom_call.1} parent=1 // pred_check_branch
      %67 = sbr.rel (0) target = $region21
    $region20: #{tpu_custom_call.1} parent=1 // pred_region
      _
    $region21: #{tpu_custom_call.1} parent=1 // pred_fallthru
      _
    // Predicated region
    $region22: #{tpu_custom_call.1} parent=1 // pred_check
      _
    $region23: #{tpu_custom_call.1} parent=1 // pred_check_branch
      %69 = sbr.rel (0) target = $region25
    $region24: #{tpu_custom_call.1} parent=1 // pred_region
      %71 = vsyncadd [#allocation9], 0
      %s72 = sshll.u32 %s5, 4
      %s73 = int_to_ptr.hbm [resolvable:$true] %s72
      %s74 = sshll.u32 [#allocation10], 4
      %s75 = int_to_ptr.vmem [resolvable:$true] %s74
      %80 = dma.hbm_to_vmem [thread:$0]  %s73, 4096, %s75, [#allocation9], 128, 128, 8
    $region25: #{tpu_custom_call.1} parent=1 // pred_fallthru
      _
    // Predicated region
    $region26: #{tpu_custom_call.1} parent=1 // pred_check
      _
    $region27: #{tpu_custom_call.1} parent=1 // pred_check_branch
      %82 = sbr.rel (0) target = $region29
    $region28: #{tpu_custom_call.1} parent=1 // pred_region
      _
    $region29: #{tpu_custom_call.1} parent=1 // pred_fallthru
      _
    // Predicated region
    $region30: #{tpu_custom_call.1} parent=1 // pred_check
      _
    $region31: #{tpu_custom_call.1} parent=1 // pred_check_branch
      %84 = sbr.rel (0) target = $region33
    $region32: #{tpu_custom_call.1} parent=1 // pred_region
      %86 = dma.done [#allocation3], 128
    $region33: #{tpu_custom_call.1} parent=1 // pred_fallthru
      _
    // Predicated region
    $region34: #{tpu_custom_call.1} parent=1 // pred_check
      _
    $region35: #{tpu_custom_call.1} parent=1 // pred_check_branch
      %88 = sbr.rel (0) target = $region37
    $region36: #{tpu_custom_call.1} parent=1 // pred_region
      %90 = dma.done [#allocation6], 512
    $region37: #{tpu_custom_call.1} parent=1 // pred_fallthru
      _
    // Predicated region
    $region38: #{tpu_custom_call.1} parent=1 // pred_check
      _
    $region39: #{tpu_custom_call.1} parent=1 // pred_check_branch
      %92 = sbr.rel (0) target = $region41
    $region40: #{tpu_custom_call.1} parent=1 // pred_region
      %94 = dma.done [#allocation6], 32
    $region41: #{tpu_custom_call.1} parent=1 // pred_fallthru
      _
    // Predicated region
    $region42: #{tpu_custom_call.1} parent=1 // pred_check
      _
    $region43: #{tpu_custom_call.1} parent=1 // pred_check_branch
      %96 = sbr.rel (0) target = $region45
    $region44: #{tpu_custom_call.1} parent=1 // pred_region
      %98 = dma.done [#allocation9], 8192
    $region45: #{tpu_custom_call.1} parent=1 // pred_fallthru
      _
    // Predicated region
    $region46: #{tpu_custom_call.1} parent=1 // pred_check
      _
    $region47: #{tpu_custom_call.1} parent=1 // pred_check_branch
      %100 = sbr.rel (0) target = $region49
    $region48: #{tpu_custom_call.1} parent=1 // pred_region
      %102 = dma.done [#allocation9], 4096
    $region49: #{tpu_custom_call.1} parent=1 // pred_fallthru
      _
    %v103 = vld [vmem:[#allocation2] sm:$0xff]
    %v104 = vld [vmem:[#allocation5] sm:$0xff]
    %v105 = vld [vmem:[#allocation5 + $0x8] sm:$0xff]
    %v106 = vld [vmem:[#allocation5 + $0x10] sm:$0xff]
    %v107 = vld [vmem:[#allocation5 + $0x18] sm:$0xff]
    %v108 = vld [vmem:[#allocation7] sm:$0x3]
    %v110 = vperm.slane %v108, 0
    %v111 = vperm.slane %v108, 1
    %vm114 = vcmask 130048
    %v116 = vsel %vm114, %v103, 0
    %118 = vmatpush.msra.mxu0 0.0
    %119 = vmatpush.msra.mxu0 0.0
    %120 = vmatpush.msra.mxu0 0.0
    %121 = vmatpush.msra.mxu0 0.0
    %122 = vmatpush.msra.mxu0 0.0
    %123 = vmatpush.msra.mxu0 0.0
    %124 = vmatpush.msra.mxu0 0.0
    %125 = vmatpush.msra.mxu0 0.0
    %126 = vmatpush.msra.mxu0 0.0
    %127 = vmatpush.msra.mxu0 0.0
    %128 = vmatpush.msra.mxu0 0.0
    %129 = vmatpush.msra.mxu0 0.0
    %130 = vmatpush.msra.mxu0 0.0
    %131 = vmatpush.msra.mxu0 0.0
    %132 = vmatpush.msra.mxu0 %v106
    %133 = vmatpush.msra.mxu0 %v104
    %134 = vmatmul.f32.gmra.mxu0 %v116
    %v135 = vpop.f32.mrf.mxu0
    %v136 = vadd.f32 %v110, %v135
    %137 = vdwg.mxu0
    %138 = vmatpush.msra.mxu0 0.0
    %139 = vmatpush.msra.mxu0 0.0
    %140 = vmatpush.msra.mxu0 0.0
    %141 = vmatpush.msra.mxu0 0.0
    %142 = vmatpush.msra.mxu0 0.0
    %143 = vmatpush.msra.mxu0 0.0
    %144 = vmatpush.msra.mxu0 0.0
    %145 = vmatpush.msra.mxu0 0.0
    %146 = vmatpush.msra.mxu0 0.0
    %147 = vmatpush.msra.mxu0 0.0
    %148 = vmatpush.msra.mxu0 0.0
    %149 = vmatpush.msra.mxu0 0.0
    %150 = vmatpush.msra.mxu0 0.0
    %151 = vmatpush.msra.mxu0 0.0
    %152 = vmatpush.msra.mxu0 %v107
    %153 = vmatpush.msra.mxu0 %v105
    %154 = vmatmul.f32.gmra.mxu0 %v116
    %v155 = vpop.f32.mrf.mxu0
    %v156 = vadd.f32 %v111, %v155
    %157 = vdwg.mxu0
    %v158 = vmax.f32 %v136, 0.0
    %v159 = vmax.f32 %v156, 0.0
    %v160 = vld [vmem:[#allocation8] sm:$0xff]
    %v161 = vld [vmem:[#allocation8 + $0x8] sm:$0xff]
    %v162 = vld [vmem:[#allocation8 + $0x10] sm:$0xff]
    %v163 = vld [vmem:[#allocation8 + $0x18] sm:$0xff]
    %v164 = vld [vmem:[#allocation8 + $0x20] sm:$0xff]
    %v165 = vld [vmem:[#allocation8 + $0x28] sm:$0xff]
    %v166 = vld [vmem:[#allocation8 + $0x30] sm:$0xff]
    %v167 = vld [vmem:[#allocation8 + $0x38] sm:$0xff]
    %v168 = vld [vmem:[#allocation8 + $0x40] sm:$0xff]
    %v169 = vld [vmem:[#allocation8 + $0x48] sm:$0xff]
    %v170 = vld [vmem:[#allocation8 + $0x50] sm:$0xff]
    %v171 = vld [vmem:[#allocation8 + $0x58] sm:$0xff]
    %v172 = vld [vmem:[#allocation8 + $0x60] sm:$0xff]
    %v173 = vld [vmem:[#allocation8 + $0x68] sm:$0xff]
    %v174 = vld [vmem:[#allocation8 + $0x70] sm:$0xff]
    %v175 = vld [vmem:[#allocation8 + $0x78] sm:$0xff]
    %v176 = vld [vmem:[#allocation8 + $0x80] sm:$0xff]
    %v177 = vld [vmem:[#allocation8 + $0x88] sm:$0xff]
    %v178 = vld [vmem:[#allocation8 + $0x90] sm:$0xff]
    %v179 = vld [vmem:[#allocation8 + $0x98] sm:$0xff]
    %v180 = vld [vmem:[#allocation8 + $0xa0] sm:$0xff]
    %v181 = vld [vmem:[#allocation8 + $0xa8] sm:$0xff]
    %v182 = vld [vmem:[#allocation8 + $0xb0] sm:$0xff]
    %v183 = vld [vmem:[#allocation8 + $0xb8] sm:$0xff]
    %v184 = vld [vmem:[#allocation8 + $0xc0] sm:$0xff]
    %v185 = vld [vmem:[#allocation8 + $0xc8] sm:$0xff]
    %v186 = vld [vmem:[#allocation8 + $0xd0] sm:$0xff]
    %v187 = vld [vmem:[#allocation8 + $0xd8] sm:$0xff]
    %v188 = vld [vmem:[#allocation8 + $0xe0] sm:$0xff]
    %v189 = vld [vmem:[#allocation8 + $0xe8] sm:$0xff]
    %v190 = vld [vmem:[#allocation8 + $0xf0] sm:$0xff]
    %v191 = vld [vmem:[#allocation8 + $0xf8] sm:$0xff]
    %v192 = vld [vmem:[#allocation8 + $0x100] sm:$0xff]
    %v193 = vld [vmem:[#allocation8 + $0x108] sm:$0xff]
    %v194 = vld [vmem:[#allocation8 + $0x110] sm:$0xff]
    %v195 = vld [vmem:[#allocation8 + $0x118] sm:$0xff]
    %v196 = vld [vmem:[#allocation8 + $0x120] sm:$0xff]
    %v197 = vld [vmem:[#allocation8 + $0x128] sm:$0xff]
    %v198 = vld [vmem:[#allocation8 + $0x130] sm:$0xff]
    %v199 = vld [vmem:[#allocation8 + $0x138] sm:$0xff]
    %v200 = vld [vmem:[#allocation8 + $0x140] sm:$0xff]
    %v201 = vld [vmem:[#allocation8 + $0x148] sm:$0xff]
    %v202 = vld [vmem:[#allocation8 + $0x150] sm:$0xff]
    %v203 = vld [vmem:[#allocation8 + $0x158] sm:$0xff]
    %v204 = vld [vmem:[#allocation8 + $0x160] sm:$0xff]
    %v205 = vld [vmem:[#allocation8 + $0x168] sm:$0xff]
    %v206 = vld [vmem:[#allocation8 + $0x170] sm:$0xff]
    %v207 = vld [vmem:[#allocation8 + $0x178] sm:$0xff]
    %v208 = vld [vmem:[#allocation8 + $0x180] sm:$0xff]
    %v209 = vld [vmem:[#allocation8 + $0x188] sm:$0xff]
    %v210 = vld [vmem:[#allocation8 + $0x190] sm:$0xff]
    %v211 = vld [vmem:[#allocation8 + $0x198] sm:$0xff]
    %v212 = vld [vmem:[#allocation8 + $0x1a0] sm:$0xff]
    %v213 = vld [vmem:[#allocation8 + $0x1a8] sm:$0xff]
    %v214 = vld [vmem:[#allocation8 + $0x1b0] sm:$0xff]
    %v215 = vld [vmem:[#allocation8 + $0x1b8] sm:$0xff]
    %v216 = vld [vmem:[#allocation8 + $0x1c0] sm:$0xff]
    %v217 = vld [vmem:[#allocation8 + $0x1c8] sm:$0xff]
    %v218 = vld [vmem:[#allocation8 + $0x1d0] sm:$0xff]
    %v219 = vld [vmem:[#allocation8 + $0x1d8] sm:$0xff]
    %v220 = vld [vmem:[#allocation8 + $0x1e0] sm:$0xff]
    %v221 = vld [vmem:[#allocation8 + $0x1e8] sm:$0xff]
    %v222 = vld [vmem:[#allocation8 + $0x1f0] sm:$0xff]
    %v223 = vld [vmem:[#allocation8 + $0x1f8] sm:$0xff]
    %v224 = vld [vmem:[%s4] sm:$0x3]
    %v226 = vperm.slane %v224, 0
    %v227 = vperm.slane %v224, 1
    %230 = vmatpush.msra.mxu0 %v190
    %231 = vmatpush.msra.mxu0 %v188
    %232 = vmatpush.msra.mxu0 %v186
    %233 = vmatpush.msra.mxu0 %v184
    %234 = vmatpush.msra.mxu0 %v182
    %235 = vmatpush.msra.mxu0 %v180
    %236 = vmatpush.msra.mxu0 %v178
    %237 = vmatpush.msra.mxu0 %v176
    %238 = vmatpush.msra.mxu0 %v174
    %239 = vmatpush.msra.mxu0 %v172
    %240 = vmatpush.msra.mxu0 %v170
    %241 = vmatpush.msra.mxu0 %v168
    %242 = vmatpush.msra.mxu0 %v166
    %243 = vmatpush.msra.mxu0 %v164
    %244 = vmatpush.msra.mxu0 %v162
    %245 = vmatpush.msra.mxu0 %v160
    %246 = vmatmul.f32.gmra.mxu0 %v158
    %v247 = vpop.f32.mrf.mxu0
    %v248 = vadd.f32 %v226, %v247
    %249 = vdwg.mxu0
    %250 = vmatpush.msra.mxu0 %v222
    %251 = vmatpush.msra.mxu0 %v220
    %252 = vmatpush.msra.mxu0 %v218
    %253 = vmatpush.msra.mxu0 %v216
    %254 = vmatpush.msra.mxu0 %v214
    %255 = vmatpush.msra.mxu0 %v212
    %256 = vmatpush.msra.mxu0 %v210
    %257 = vmatpush.msra.mxu0 %v208
    %258 = vmatpush.msra.mxu0 %v206
    %259 = vmatpush.msra.mxu0 %v204
    %260 = vmatpush.msra.mxu0 %v202
    %261 = vmatpush.msra.mxu0 %v200
    %262 = vmatpush.msra.mxu0 %v198
    %263 = vmatpush.msra.mxu0 %v196
    %264 = vmatpush.msra.mxu0 %v194
    %265 = vmatpush.msra.mxu0 %v192
    %266 = vmatmul.f32.gmra.mxu0 %v159
    %v267 = vpop.f32.mrf.mxu0
    %v268 = vadd.f32 %v248, %v267
    %269 = vdwg.mxu0
    %270 = vmatpush.msra.mxu0 %v191
    %271 = vmatpush.msra.mxu0 %v189
    %272 = vmatpush.msra.mxu0 %v187
    %273 = vmatpush.msra.mxu0 %v185
    %274 = vmatpush.msra.mxu0 %v183
    %275 = vmatpush.msra.mxu0 %v181
    %276 = vmatpush.msra.mxu0 %v179
    %277 = vmatpush.msra.mxu0 %v177
    %278 = vmatpush.msra.mxu0 %v175
    %279 = vmatpush.msra.mxu0 %v173
    %280 = vmatpush.msra.mxu0 %v171
    %281 = vmatpush.msra.mxu0 %v169
    %282 = vmatpush.msra.mxu0 %v167
    %283 = vmatpush.msra.mxu0 %v165
    %284 = vmatpush.msra.mxu0 %v163
    %285 = vmatpush.msra.mxu0 %v161
    %286 = vmatmul.f32.gmra.mxu0 %v158
    %v287 = vpop.f32.mrf.mxu0
    %v288 = vadd.f32 %v227, %v287
    %289 = vdwg.mxu0
    %290 = vmatpush.msra.mxu0 %v223
    %291 = vmatpush.msra.mxu0 %v221
    %292 = vmatpush.msra.mxu0 %v219
    %293 = vmatpush.msra.mxu0 %v217
    %294 = vmatpush.msra.mxu0 %v215
    %295 = vmatpush.msra.mxu0 %v213
    %296 = vmatpush.msra.mxu0 %v211
    %297 = vmatpush.msra.mxu0 %v209
    %298 = vmatpush.msra.mxu0 %v207
    %299 = vmatpush.msra.mxu0 %v205
    %300 = vmatpush.msra.mxu0 %v203
    %301 = vmatpush.msra.mxu0 %v201
    %302 = vmatpush.msra.mxu0 %v199
    %303 = vmatpush.msra.mxu0 %v197
    %304 = vmatpush.msra.mxu0 %v195
    %305 = vmatpush.msra.mxu0 %v193
    %306 = vmatmul.f32.gmra.mxu0 %v159
    %v307 = vpop.f32.mrf.mxu0
    %v308 = vadd.f32 %v288, %v307
    %309 = vdwg.mxu0
    %v310 = vmax.f32 %v268, 0.0
    %v311 = vmax.f32 %v308, 0.0
    %v312 = vld [vmem:[#allocation10] sm:$0xff]
    %v313 = vld [vmem:[#allocation10 + $0x8] sm:$0xff]
    %v314 = vld [vmem:[#allocation10 + $0x10] sm:$0xff]
    %v315 = vld [vmem:[#allocation10 + $0x18] sm:$0xff]
    %v316 = vld [vmem:[#allocation10 + $0x20] sm:$0xff]
    %v317 = vld [vmem:[#allocation10 + $0x28] sm:$0xff]
    %v318 = vld [vmem:[#allocation10 + $0x30] sm:$0xff]
    %v319 = vld [vmem:[#allocation10 + $0x38] sm:$0xff]
    %v320 = vld [vmem:[#allocation10 + $0x40] sm:$0xff]
    %v321 = vld [vmem:[#allocation10 + $0x48] sm:$0xff]
    %v322 = vld [vmem:[#allocation10 + $0x50] sm:$0xff]
    %v323 = vld [vmem:[#allocation10 + $0x58] sm:$0xff]
    %v324 = vld [vmem:[#allocation10 + $0x60] sm:$0xff]
    %v325 = vld [vmem:[#allocation10 + $0x68] sm:$0xff]
    %v326 = vld [vmem:[#allocation10 + $0x70] sm:$0xff]
    %v327 = vld [vmem:[#allocation10 + $0x78] sm:$0xff]
    %v328 = vld [vmem:[#allocation10 + $0x80] sm:$0xff]
    %v329 = vld [vmem:[#allocation10 + $0x88] sm:$0xff]
    %v330 = vld [vmem:[#allocation10 + $0x90] sm:$0xff]
    %v331 = vld [vmem:[#allocation10 + $0x98] sm:$0xff]
    %v332 = vld [vmem:[#allocation10 + $0xa0] sm:$0xff]
    %v333 = vld [vmem:[#allocation10 + $0xa8] sm:$0xff]
    %v334 = vld [vmem:[#allocation10 + $0xb0] sm:$0xff]
    %v335 = vld [vmem:[#allocation10 + $0xb8] sm:$0xff]
    %v336 = vld [vmem:[#allocation10 + $0xc0] sm:$0xff]
    %v337 = vld [vmem:[#allocation10 + $0xc8] sm:$0xff]
    %v338 = vld [vmem:[#allocation10 + $0xd0] sm:$0xff]
    %v339 = vld [vmem:[#allocation10 + $0xd8] sm:$0xff]
    %v340 = vld [vmem:[#allocation10 + $0xe0] sm:$0xff]
    %v341 = vld [vmem:[#allocation10 + $0xe8] sm:$0xff]
    %v342 = vld [vmem:[#allocation10 + $0xf0] sm:$0xff]
    %v343 = vld [vmem:[#allocation10 + $0xf8] sm:$0xff]
    %v344 = vld [vmem:[%s6] sm:$0x1]
    %v346 = vperm.slane %v344, 0
    %348 = vmatpush.msra.mxu0 %v327
    %349 = vmatpush.msra.mxu0 %v326
    %350 = vmatpush.msra.mxu0 %v325
    %351 = vmatpush.msra.mxu0 %v324
    %352 = vmatpush.msra.mxu0 %v323
    %353 = vmatpush.msra.mxu0 %v322
    %354 = vmatpush.msra.mxu0 %v321
    %355 = vmatpush.msra.mxu0 %v320
    %356 = vmatpush.msra.mxu0 %v319
    %357 = vmatpush.msra.mxu0 %v318
    %358 = vmatpush.msra.mxu0 %v317
    %359 = vmatpush.msra.mxu0 %v316
    %360 = vmatpush.msra.mxu0 %v315
    %361 = vmatpush.msra.mxu0 %v314
    %362 = vmatpush.msra.mxu0 %v313
    %363 = vmatpush.msra.mxu0 %v312
    %364 = vmatmul.f32.gmra.mxu0 %v310
    %v365 = vpop.f32.mrf.mxu0
    %v366 = vadd.f32 %v346, %v365
    %367 = vdwg.mxu0
    %368 = vmatpush.msra.mxu0 %v343
    %369 = vmatpush.msra.mxu0 %v342
    %370 = vmatpush.msra.mxu0 %v341
    %371 = vmatpush.msra.mxu0 %v340
    %372 = vmatpush.msra.mxu0 %v339
    %373 = vmatpush.msra.mxu0 %v338
    %374 = vmatpush.msra.mxu0 %v337
    %375 = vmatpush.msra.mxu0 %v336
    %376 = vmatpush.msra.mxu0 %v335
    %377 = vmatpush.msra.mxu0 %v334
    %378 = vmatpush.msra.mxu0 %v333
    %379 = vmatpush.msra.mxu0 %v332
    %380 = vmatpush.msra.mxu0 %v331
    %381 = vmatpush.msra.mxu0 %v330
    %382 = vmatpush.msra.mxu0 %v329
    %383 = vmatpush.msra.mxu0 %v328
    %384 = vmatmul.f32.gmra.mxu0 %v311
    %v385 = vpop.f32.mrf.mxu0
    %v386 = vadd.f32 %v366, %v385
    %387 = vdwg.mxu0
    %v388 = vtanh.pop %v386
    %389 = vst [vmem:[#allocation11] sm:$0xff] %v388
    // Predicated region
    $region50: #{tpu_custom_call.1} parent=1 // pred_check
      _
    $region51: #{tpu_custom_call.1} parent=1 // pred_check_branch
      %391 = sbr.rel (0) target = $region53
    $region52: #{tpu_custom_call.1} parent=1 // pred_region
      %393 = vsyncadd [#allocation4], 96
      %s394 = sshll.u32 [#allocation11], 4
      %s395 = int_to_ptr.vmem [resolvable:$true] %s394
      %s396 = sshll.u32 %s7, 4
      %s397 = int_to_ptr.hbm [resolvable:$true] %s396
      %402 = dma.vmem_to_hbm [thread:$0]  %s395, 32, %s397, [#allocation4], 32, 32, 2
    $region53: #{tpu_custom_call.1} parent=1 // pred_fallthru
      _
    // Predicated region
    $region54: #{tpu_custom_call.1} parent=1 // pred_check
      _
    $region55: #{tpu_custom_call.1} parent=1 // pred_check_branch
      %404 = sbr.rel (0) target = $region57
    $region56: #{tpu_custom_call.1} parent=1 // pred_region
      %406 = dma.done [#allocation4], 128
    $region57: #{tpu_custom_call.1} parent=1 // pred_fallthru
      _
    %407 = vsyncpa [#allocation3], 1
    %408 = vsyncpa [#allocation6], 1
    %409 = vsyncpa [#allocation9], 1
    %410 = vsyncpa [#allocation4], 1

</llo_original>
